<compile_context>
chip_gen: v6e
topology: v6e:2x2x1
jax: 0.10.0
libtpu: 0.0.40
codegen_flags: <defaults>
</compile_context>

<pallas_src>
import math

import jax
import jax.numpy as jnp
from jax.experimental import pallas as pl
from jax.experimental.pallas import tpu as pltpu


def _flatten_copy_kernel(x_ref, o_ref):
    # x_ref / o_ref are (tile_b, tile_f) VMEM tiles; lane-dense straight copy.
    o_ref[...] = x_ref[...]


_TARGET_BLOCK_BYTES = 1 << 20   # ~1 MiB per block: near-roofline for a copy
_VMEM_CAP_BYTES = 32 << 20      # safe on v5e/v6e/v7x


def _round_down(x: int, m: int) -> int:
    return (x // m) * m


def _round_up(x: int, m: int) -> int:
    return -(-x // m) * m


def flatten_forward(features: jax.Array) -> jax.Array:
    """Pallas equivalent of Flatten.forward: features.view(b, -1)."""
    b = features.shape[0]
    f = math.prod(features.shape[1:]) if features.ndim > 1 else 1

    # Glue: row-major collapse, identical semantics to torch .view(b, -1) on a
    # contiguous NCHW tensor.  Metadata-only at trace level.
    x2d = features.reshape(b, f)

    itemsize = jnp.dtype(features.dtype).itemsize
    total_bytes = b * f * itemsize

    if total_bytes <= 2 * _TARGET_BLOCK_BYTES:
        # Single block covering the whole array: both block dims equal the
        # array dims, so the (8,128) constraint is satisfied for arbitrary
        # shapes, and tiny inputs pay grid overhead exactly once.
        tile_b, tile_f = b, f
    else:
        # Sublane tile: full batch unless one 128-lane column of it already
        # exceeds the per-block budget; then drop to a multiple of 8
        # (boundary blocks along b are masked by Pallas).
        if b <= 8 or b * 128 * itemsize <= _TARGET_BLOCK_BYTES:
            tile_b = b
        else:
            tile_b = max(8, _round_down(_TARGET_BLOCK_BYTES // (128 * itemsize), 8))
            tile_b = min(tile_b, b)

        # Lane tile: multiple of 128 sized to ~1 MiB per block.  f need not be
        # a multiple of tile_f — the trailing block is masked, interior blocks
        # use unmasked lane-dense stores.
        if f < 128:
            # Must equal the full dim when below one lane-width.
            tile_f = f
        else:
            tile_f = max(128, _round_down(
                _TARGET_BLOCK_BYTES // (tile_b * itemsize), 128))
            tile_f = min(tile_f, _round_up(f, 128))

    grid = (pl.cdiv(b, tile_b), pl.cdiv(f, tile_f))

    # VMEM budget: double-buffered input + output blocks, with headroom.
    block_bytes = tile_b * tile_f * itemsize
    vmem_limit = int(min(_VMEM_CAP_BYTES, max(6 * block_bytes, 4 << 20)))

    out = pl.pallas_call(
        _flatten_copy_kernel,
        out_shape=jax.ShapeDtypeStruct((b, f), features.dtype),
        grid_spec=pltpu.PrefetchScalarGridSpec(
            num_scalar_prefetch=0,
            grid=grid,
            in_specs=[pl.BlockSpec((tile_b, tile_f), lambda i, j: (i, j))],
            out_specs=pl.BlockSpec((tile_b, tile_f), lambda i, j: (i, j)),
        ),
        compiler_params=pltpu.CompilerParams(
            dimension_semantics=("parallel", "parallel"),
            vmem_limit_bytes=vmem_limit,
        ),
    )(x2d)
    return out


if __name__ == "__main__":
    key = jax.random.PRNGKey(0)
    # Small shape consistent with the module's NCHW convention.
    B, C, H, W = 2, 4, 16, 16
    x = jax.random.normal(key, (B, C, H, W), dtype=jnp.float32)

    y = flatten_forward(x)
    y = jax.block_until_ready(y)

    # Reference semantics: features.view(b, -1) == row-major reshape.
    y_ref = x.reshape(B, C * H * W)
    assert y.shape == (B, C * H * W), y.shape
    assert y.dtype == x.dtype
    assert bool(jnp.array_equal(y, y_ref))

    print("KERNEL_OK")
</pallas_src>

<mosaic_0001>
module attributes {stable_mosaic.version = 11 : i64} {
  func.func @_flatten_copy_kernel(%arg0: i32, %arg1: i32, %arg2: memref<2x1024xf32, #tpu.memory_space<vmem>>, %arg3: memref<2x1024xf32, #tpu.memory_space<vmem>>) attributes {dimension_semantics = [#tpu.dimension_semantics<parallel>, #tpu.dimension_semantics<parallel>], iteration_bounds = array<i64: 1, 1>, scalar_prefetch = 0 : i64, scratch_operands = 0 : i64, tpu.core_type = #tpu.core_type<tc>, window_params = [{transform_indices = @transform_0, window_bounds = array<i64: 2, 1024>}, {transform_indices = @transform_1, window_bounds = array<i64: 2, 1024>}]} {
    %c0 = arith.constant 0 : index
    %c0_0 = arith.constant 0 : index
    %0 = vector.load %arg2[%c0, %c0_0] : memref<2x1024xf32, #tpu.memory_space<vmem>>, vector<2x1024xf32>
    %c0_1 = arith.constant 0 : index
    %c0_2 = arith.constant 0 : index
    %1 = vector.load %arg3[%c0_1, %c0_2] : memref<2x1024xf32, #tpu.memory_space<vmem>>, vector<2x1024xf32>
    tpu.vector_store %arg3[%c0_1, %c0_2], %0 {strides = array<i32>} : memref<2x1024xf32, #tpu.memory_space<vmem>>, vector<2x1024xf32>,
    return
  }
  func.func @transform_0(%arg0: i32, %arg1: i32) -> (i32, i32) {
    %c0_i32 = arith.constant 0 : i32
    return %arg0, %arg1 : i32, i32
  }
  func.func @transform_1(%arg0: i32, %arg1: i32) -> (i32, i32) {
    %c0_i32 = arith.constant 0 : i32
    return %arg0, %arg1 : i32, i32
  }
}

</mosaic_0001>

<llo_original>
// kernel: tpu_custom_call.1
$region0: #{tpu_custom_call.1}
  #allocation0 [shape = 'u32[]', space=smem, size = 0x4, offset = 0x4, fixed_abs, tag = 'smem constant byte address 0x4 - core index']
  #allocation1 [shape = 'u32[144,128]{1,0:T(1,128)}', space=vmem, size = 0x12000, scoped, tag = 'internal scratch']
  %s0 = inlined_call_operand.hbm [shape: f32[2,1024], index: 0, kind: input, shape index: {}]
  %s1 = inlined_call_operand.hbm [shape: f32[2,1024], index: 1, kind: output, shape index: {}]
  %s2 = sld [smem:[#allocation0]]
  $region18: #{tpu_custom_call.1} parent=0
    _
  %s4 = ssub.s32 1, %s2
  %s5 = scalar_select 0, %s4, %s2
  $region1: #{tpu_custom_call.1} parent=0
    #allocation2 [shape = 'u8[8192]{0}', space=vmem, size = 0x2000, scoped, tag = 'input window, operand 0, single buffered']
    #allocation3 [shape = 's32[1]{0}', space=sflag, size = 0x4, scoped, tag = 'scoped memory for tpu_custom_call.1']
    #allocation4 [shape = 's32[1]{0}', space=sflag, size = 0x4, scoped, tag = 'scoped memory for tpu_custom_call.1']
    #allocation5 [shape = 'u8[8192]{0}', space=vmem, size = 0x2000, scoped, tag = 'output window, operand 0, single buffered']
    %6 = vsyncpa [#allocation3], 0
    %7 = vsyncpa [#allocation4], 0
    // Predicated region
    $region2: #{tpu_custom_call.1} parent=1 // pred_check
      _
    $region3: #{tpu_custom_call.1} parent=1 // pred_check_branch
      %9 = sbr.rel (0) target = $region5
    $region4: #{tpu_custom_call.1} parent=1 // pred_region
      %s11 = ssub.s32 256, 256
      %12 = vsyncadd [#allocation3], %s11
      %s14 = sshll.u32 [#allocation2], 4
      %s15 = int_to_ptr.vmem [resolvable:$true] %s14
      %17 = dma.hbm_to_vmem [thread:$0]  %s0, 256, %s15, [#allocation3]
    $region5: #{tpu_custom_call.1} parent=1 // pred_fallthru
      _
    // Predicated region
    $region6: #{tpu_custom_call.1} parent=1 // pred_check
      _
    $region7: #{tpu_custom_call.1} parent=1 // pred_check_branch
      %19 = sbr.rel (0) target = $region9
    $region8: #{tpu_custom_call.1} parent=1 // pred_region
      %20 = dma.done [#allocation3], 256
    $region9: #{tpu_custom_call.1} parent=1 // pred_fallthru
      _
    %v21 = vld [vmem:[#allocation2] sm:$0xff]
    %v22 = vld [vmem:[#allocation2 + $0x8] sm:$0xff]
    %23 = vst [vmem:[#allocation5] sm:$0xff] %v21
    %24 = vst [vmem:[#allocation5 + $0x8] sm:$0xff] %v22
    // Predicated region
    $region10: #{tpu_custom_call.1} parent=1 // pred_check
      _
    $region11: #{tpu_custom_call.1} parent=1 // pred_check_branch
      %26 = sbr.rel (0) target = $region13
    $region12: #{tpu_custom_call.1} parent=1 // pred_region
      %s28 = ssub.s32 256, 256
      %29 = vsyncadd [#allocation4], %s28
      %s31 = sshll.u32 [#allocation5], 4
      %s32 = int_to_ptr.vmem [resolvable:$true] %s31
      %34 = dma.vmem_to_hbm [thread:$0]  %s32, 256, %s1, [#allocation4]
    $region13: #{tpu_custom_call.1} parent=1 // pred_fallthru
      _
    // Predicated region
    $region14: #{tpu_custom_call.1} parent=1 // pred_check
      _
    $region15: #{tpu_custom_call.1} parent=1 // pred_check_branch
      %36 = sbr.rel (0) target = $region17
    $region16: #{tpu_custom_call.1} parent=1 // pred_region
      %37 = dma.done [#allocation4], 256
    $region17: #{tpu_custom_call.1} parent=1 // pred_fallthru
      _
    %38 = vsyncpa [#allocation3], 1
    %39 = vsyncpa [#allocation4], 1

</llo_original>
